<compile_context>
chip_gen: v7x
topology: tpu7x:2x2x1
jax: 0.10.0
libtpu: 0.0.40
codegen_flags: <defaults>
</compile_context>

<pallas_src>
import functools

import jax
import jax.numpy as jnp
from jax.experimental import pallas as pl
from jax.experimental.pallas import tpu as pltpu

STATE_DIM = 8
ACTION_DIM = 4
H1 = 400
H2 = 300

# Lane-padded ("_P") feature widths: multiples of 128.
H1_P = 512
H2_P = 384
OUT_P = 128


def _round_up(n, m):
    return ((n + m - 1) // m) * m


def mlp_kernel(x_ref, w1_ref, b1_ref, w2_ref, b2_ref, w3_ref, b3_ref, o_ref):
    # One batch tile per grid step; all (padded, bf16) weights resident in VMEM.
    # MXU accumulates in f32; bias-add / ReLU in f32 on the VPU.
    x = x_ref[...].astype(jnp.bfloat16)
    h1 = jnp.dot(x, w1_ref[...], preferred_element_type=jnp.float32) + b1_ref[...]
    h1 = jnp.maximum(h1, 0.0).astype(jnp.bfloat16)
    h2 = jnp.dot(h1, w2_ref[...], preferred_element_type=jnp.float32) + b2_ref[...]
    h2 = jnp.maximum(h2, 0.0).astype(jnp.bfloat16)
    out = jnp.dot(h2, w3_ref[...], preferred_element_type=jnp.float32) + b3_ref[...]
    o_ref[...] = out.astype(o_ref.dtype)


@jax.jit
def net_forward(x, w1, b1, w2, b2, w3, b3):
    """x: (batch, 8) f32. Weights are padded bf16 (in, out); biases padded f32 (1, out).

    Returns (batch, ACTION_DIM) f32.
    """
    batch = x.shape[0]
    tb = min(128, _round_up(batch, 8))          # batch tile (sublane-aligned)
    b_pad = _round_up(batch, tb)
    if b_pad != batch:
        x = jnp.pad(x, ((0, b_pad - batch), (0, 0)))

    grid = (pl.cdiv(b_pad, tb),)

    def batch_spec(block_cols):
        return pl.BlockSpec((tb, block_cols), lambda i: (i, 0))

    def resident_spec(shape):
        # Whole array as one block, constant index -> DMA'd once, stays resident.
        return pl.BlockSpec(shape, lambda i: (0, 0))

    out_padded = pl.pallas_call(
        mlp_kernel,
        out_shape=jax.ShapeDtypeStruct((b_pad, OUT_P), jnp.float32),
        grid=grid,
        in_specs=[
            batch_spec(STATE_DIM),
            resident_spec(w1.shape),
            resident_spec(b1.shape),
            resident_spec(w2.shape),
            resident_spec(b2.shape),
            resident_spec(w3.shape),
            resident_spec(b3.shape),
        ],
        out_specs=batch_spec(OUT_P),
        compiler_params=pltpu.CompilerParams(
            dimension_semantics=("parallel",),
        ),
    )(x, w1, b1, w2, b2, w3, b3)

    return out_padded[:batch, :ACTION_DIM]


def init_params(key):
    """PyTorch nn.Linear-style init (U(-1/sqrt(fan_in), +1/sqrt(fan_in))).

    Weights are returned transposed to (in_features, out_features), zero-padded
    to lane-aligned widths, and cast to bf16.  Biases stay f32, zero-padded,
    kept 2-D (1, out) so every kernel operand is >= 2-D.
    """
    keys = jax.random.split(key, 6)

    def linear(kw, kb, fan_in, fan_out, fan_in_pad, fan_out_pad):
        bound = 1.0 / jnp.sqrt(jnp.float32(fan_in))
        w = jax.random.uniform(kw, (fan_in, fan_out), jnp.float32, -bound, bound)
        b = jax.random.uniform(kb, (1, fan_out), jnp.float32, -bound, bound)
        w = jnp.pad(w, ((0, fan_in_pad - fan_in), (0, fan_out_pad - fan_out)))
        b = jnp.pad(b, ((0, 0), (0, fan_out_pad - fan_out)))
        return w.astype(jnp.bfloat16), b

    w1, b1 = linear(keys[0], keys[1], STATE_DIM, H1, STATE_DIM, H1_P)
    w2, b2 = linear(keys[2], keys[3], H1, H2, H1_P, H2_P)
    w3, b3 = linear(keys[4], keys[5], H2, ACTION_DIM, H2_P, OUT_P)
    return w1, b1, w2, b2, w3, b3


def reference_forward(x, w1, b1, w2, b2, w3, b3):
    """Pure-JAX reference with the same bf16-input / f32-accumulate numerics."""
    def dot_f32(a, w):
        return jnp.dot(a.astype(jnp.bfloat16).astype(jnp.float32),
                       w.astype(jnp.float32))

    h1 = jnp.maximum(dot_f32(x, w1) + b1, 0.0)
    h2 = jnp.maximum(dot_f32(h1, w2) + b2, 0.0)
    out = dot_f32(h2, w3) + b3
    return out[:, :ACTION_DIM]


if __name__ == "__main__":
    key = jax.random.PRNGKey(0)
    kx, kp = jax.random.split(key)

    batch = 8  # small batch of states; each state has state_dim=8 features
    x = jax.random.normal(kx, (batch, STATE_DIM), jnp.float32)
    params = init_params(kp)

    out = net_forward(x, *params)
    out = jax.block_until_ready(out)

    ref = reference_forward(x, *params)
    assert out.shape == (batch, ACTION_DIM), out.shape
    assert jnp.allclose(out, ref, atol=2e-3, rtol=2e-3), (
        float(jnp.max(jnp.abs(out - ref)))
    )
    print("KERNEL_OK")
</pallas_src>

<mosaic_0001>
module attributes {stable_mosaic.version = 11 : i64} {
  func.func @mlp_kernel(%arg0: i32, %arg1: memref<8x8xf32, #tpu.memory_space<vmem>>, %arg2: memref<8x512xbf16, #tpu.memory_space<vmem>>, %arg3: memref<1x512xf32, #tpu.memory_space<vmem>>, %arg4: memref<512x384xbf16, #tpu.memory_space<vmem>>, %arg5: memref<1x384xf32, #tpu.memory_space<vmem>>, %arg6: memref<384x128xbf16, #tpu.memory_space<vmem>>, %arg7: memref<1x128xf32, #tpu.memory_space<vmem>>, %arg8: memref<8x128xf32, #tpu.memory_space<vmem>>) attributes {dimension_semantics = [#tpu.dimension_semantics<parallel>], iteration_bounds = array<i64: 1>, scalar_prefetch = 0 : i64, scratch_operands = 0 : i64, tpu.core_type = #tpu.core_type<tc>, window_params = [{transform_indices = @transform_0, window_bounds = array<i64: 8, 8>}, {pipeline_mode = #tpu.pipeline_mode<synchronous>, transform_indices = @transform_1, window_bounds = array<i64: 8, 512>}, {pipeline_mode = #tpu.pipeline_mode<synchronous>, transform_indices = @transform_2, window_bounds = array<i64: 1, 512>}, {pipeline_mode = #tpu.pipeline_mode<synchronous>, transform_indices = @transform_3, window_bounds = array<i64: 512, 384>}, {pipeline_mode = #tpu.pipeline_mode<synchronous>, transform_indices = @transform_4, window_bounds = array<i64: 1, 384>}, {pipeline_mode = #tpu.pipeline_mode<synchronous>, transform_indices = @transform_5, window_bounds = array<i64: 384, 128>}, {pipeline_mode = #tpu.pipeline_mode<synchronous>, transform_indices = @transform_6, window_bounds = array<i64: 1, 128>}, {transform_indices = @transform_7, window_bounds = array<i64: 8, 128>}]} {
    %c0 = arith.constant 0 : index
    %c0_0 = arith.constant 0 : index
    %0 = vector.load %arg1[%c0, %c0_0] : memref<8x8xf32, #tpu.memory_space<vmem>>, vector<8x8xf32>
    %1 = arith.truncf %0 : vector<8x8xf32> to vector<8x8xbf16>
    %c0_1 = arith.constant 0 : index
    %c0_2 = arith.constant 0 : index
    %2 = vector.load %arg2[%c0_1, %c0_2] : memref<8x512xbf16, #tpu.memory_space<vmem>>, vector<8x512xbf16>
    %cst = arith.constant dense<0.000000e+00> : vector<8x512xf32>
    %3 = tpu.matmul %1, %2, %cst {dimension_numbers = #tpu.dot_dimension_numbers<[1], [0], [0], [1], [0, 0, 1, 1], [], []>} : vector<8x8xbf16>, vector<8x512xbf16>, vector<8x512xf32> -> vector<8x512xf32>
    %c0_3 = arith.constant 0 : index
    %c0_4 = arith.constant 0 : index
    %4 = vector.load %arg3[%c0_3, %c0_4] : memref<1x512xf32, #tpu.memory_space<vmem>>, vector<1x512xf32>
    %5 = vector.broadcast %4 : vector<1x512xf32> to vector<8x512xf32>
    %6 = arith.addf %3, %5 : vector<8x512xf32>
    %cst_5 = arith.constant 0.000000e+00 : f32
    %7 = vector.broadcast %cst_5 : f32 to vector<8x512xf32>
    %8 = arith.maximumf %6, %7 : vector<8x512xf32>
    %9 = arith.truncf %8 : vector<8x512xf32> to vector<8x512xbf16>
    %c0_6 = arith.constant 0 : index
    %c0_7 = arith.constant 0 : index
    %10 = vector.load %arg4[%c0_6, %c0_7] : memref<512x384xbf16, #tpu.memory_space<vmem>>, vector<512x384xbf16>
    %cst_8 = arith.constant dense<0.000000e+00> : vector<8x384xf32>
    %11 = tpu.matmul %9, %10, %cst_8 {dimension_numbers = #tpu.dot_dimension_numbers<[1], [0], [0], [1], [0, 0, 1, 1], [], []>} : vector<8x512xbf16>, vector<512x384xbf16>, vector<8x384xf32> -> vector<8x384xf32>
    %c0_9 = arith.constant 0 : index
    %c0_10 = arith.constant 0 : index
    %12 = vector.load %arg5[%c0_9, %c0_10] : memref<1x384xf32, #tpu.memory_space<vmem>>, vector<1x384xf32>
    %13 = vector.broadcast %12 : vector<1x384xf32> to vector<8x384xf32>
    %14 = arith.addf %11, %13 : vector<8x384xf32>
    %cst_11 = arith.constant 0.000000e+00 : f32
    %15 = vector.broadcast %cst_11 : f32 to vector<8x384xf32>
    %16 = arith.maximumf %14, %15 : vector<8x384xf32>
    %17 = arith.truncf %16 : vector<8x384xf32> to vector<8x384xbf16>
    %c0_12 = arith.constant 0 : index
    %c0_13 = arith.constant 0 : index
    %18 = vector.load %arg6[%c0_12, %c0_13] : memref<384x128xbf16, #tpu.memory_space<vmem>>, vector<384x128xbf16>
    %cst_14 = arith.constant dense<0.000000e+00> : vector<8x128xf32>
    %19 = tpu.matmul %17, %18, %cst_14 {dimension_numbers = #tpu.dot_dimension_numbers<[1], [0], [0], [1], [0, 0, 1, 1], [], []>} : vector<8x384xbf16>, vector<384x128xbf16>, vector<8x128xf32> -> vector<8x128xf32>
    %c0_15 = arith.constant 0 : index
    %c0_16 = arith.constant 0 : index
    %20 = vector.load %arg7[%c0_15, %c0_16] : memref<1x128xf32, #tpu.memory_space<vmem>>, vector<1x128xf32>
    %21 = vector.broadcast %20 : vector<1x128xf32> to vector<8x128xf32>
    %22 = arith.addf %19, %21 : vector<8x128xf32>
    %c0_17 = arith.constant 0 : index
    %c0_18 = arith.constant 0 : index
    %23 = vector.load %arg8[%c0_17, %c0_18] : memref<8x128xf32, #tpu.memory_space<vmem>>, vector<8x128xf32>
    tpu.vector_store %arg8[%c0_17, %c0_18], %22 {strides = array<i32>} : memref<8x128xf32, #tpu.memory_space<vmem>>, vector<8x128xf32>,
    return
  }
  func.func @transform_0(%arg0: i32) -> (i32, i32) {
    %c0_i32 = arith.constant 0 : i32
    %c0_i32_0 = arith.constant 0 : i32
    return %arg0, %c0_i32 : i32, i32
  }
  func.func @transform_1(%arg0: i32) -> (i32, i32) {
    %c0_i32 = arith.constant 0 : i32
    %c0_i32_0 = arith.constant 0 : i32
    %c0_i32_1 = arith.constant 0 : i32
    return %c0_i32, %c0_i32_0 : i32, i32
  }
  func.func @transform_2(%arg0: i32) -> (i32, i32) {
    %c0_i32 = arith.constant 0 : i32
    %c0_i32_0 = arith.constant 0 : i32
    %c0_i32_1 = arith.constant 0 : i32
    return %c0_i32, %c0_i32_0 : i32, i32
  }
  func.func @transform_3(%arg0: i32) -> (i32, i32) {
    %c0_i32 = arith.constant 0 : i32
    %c0_i32_0 = arith.constant 0 : i32
    %c0_i32_1 = arith.constant 0 : i32
    return %c0_i32, %c0_i32_0 : i32, i32
  }
  func.func @transform_4(%arg0: i32) -> (i32, i32) {
    %c0_i32 = arith.constant 0 : i32
    %c0_i32_0 = arith.constant 0 : i32
    %c0_i32_1 = arith.constant 0 : i32
    return %c0_i32, %c0_i32_0 : i32, i32
  }
  func.func @transform_5(%arg0: i32) -> (i32, i32) {
    %c0_i32 = arith.constant 0 : i32
    %c0_i32_0 = arith.constant 0 : i32
    %c0_i32_1 = arith.constant 0 : i32
    return %c0_i32, %c0_i32_0 : i32, i32
  }
  func.func @transform_6(%arg0: i32) -> (i32, i32) {
    %c0_i32 = arith.constant 0 : i32
    %c0_i32_0 = arith.constant 0 : i32
    %c0_i32_1 = arith.constant 0 : i32
    return %c0_i32, %c0_i32_0 : i32, i32
  }
  func.func @transform_7(%arg0: i32) -> (i32, i32) {
    %c0_i32 = arith.constant 0 : i32
    %c0_i32_0 = arith.constant 0 : i32
    return %arg0, %c0_i32 : i32, i32
  }
}

</mosaic_0001>

<llo_original>
// kernel: net_forward.1
$region0: #{net_forward.1}
  #allocation0 [shape = 'u32[]', space=smem, size = 0x4, offset = 0x4, fixed_abs, tag = 'smem constant byte address 0x4 - core index']
  #allocation1 [shape = 'u32[144,128]{1,0:T(1,128)}', space=vmem, size = 0x12000, scoped, tag = 'internal scratch']
  %s0 = inlined_call_operand.hbm [shape: f32[8,8], index: 0, kind: input, shape index: {}]
  %s1 = inlined_call_operand.hbm [shape: bf16[8,512], index: 1, kind: input, shape index: {}]
  %s2 = inlined_call_operand.vmem [shape: f32[1,512], index: 2, kind: input, shape index: {}]
  %s3 = inlined_call_operand.hbm [shape: bf16[512,384], index: 3, kind: input, shape index: {}]
  %s4 = inlined_call_operand.vmem [shape: f32[1,384], index: 4, kind: input, shape index: {}]
  %s5 = inlined_call_operand.hbm [shape: bf16[384,128], index: 5, kind: input, shape index: {}]
  %s6 = inlined_call_operand.vmem [shape: f32[1,128], index: 6, kind: input, shape index: {}]
  %s7 = inlined_call_operand.vmem [shape: f32[8,128], index: 7, kind: output, shape index: {}]
  %s8 = sld [smem:[#allocation0]]
  $region54: #{net_forward.1} parent=0
    _
  %s10 = ssub.s32 1, %s8
  %s11 = scalar_select 0, %s10, %s8
  $region1: #{net_forward.1} parent=0
    #allocation2 [shape = 'u8[4096]{0}', space=vmem, size = 0x1000, scoped, tag = 'input window, operand 0, single buffered']
    #allocation3 [shape = 's32[1]{0}', space=sflag, size = 0x4, scoped, tag = 'scoped memory for net_forward.1']
    #allocation4 [shape = 'u8[8192]{0}', space=vmem, size = 0x2000, scoped, tag = 'input window, operand 1, single buffered']
    #allocation5 [shape = 's32[1]{0}', space=sflag, size = 0x4, scoped, tag = 'scoped memory for net_forward.1']
    #allocation6 [shape = 'u8[393216]{0}', space=vmem, size = 0x60000, scoped, tag = 'input window, operand 3, single buffered']
    #allocation7 [shape = 'u8[98304]{0}', space=vmem, size = 0x18000, scoped, tag = 'input window, operand 5, single buffered']
    #allocation8 [shape = 's32[1]{0}', space=sflag, size = 0x4, scoped, tag = 'scoped memory for net_forward.1']
    %12 = vsyncpa [#allocation3], 0
    %13 = vsyncpa [#allocation5], 0
    %14 = vsyncpa [#allocation8], 0
    // Predicated region
    $region2: #{net_forward.1} parent=1 // pred_check
      _
    $region3: #{net_forward.1} parent=1 // pred_check_branch
      %16 = sbr.rel (0) target = $region5
    $region4: #{net_forward.1} parent=1 // pred_region
      %s18 = ssub.s32 128, 128
      %19 = vsyncadd [#allocation3], %s18
      %s21 = sshll.u32 [#allocation2], 4
      %s22 = int_to_ptr.vmem [resolvable:$true] %s21
      %24 = dma.hbm_to_vmem [thread:$0]  %s0, 128, %s22, [#allocation3]
    $region5: #{net_forward.1} parent=1 // pred_fallthru
      _
    // Predicated region
    $region6: #{net_forward.1} parent=1 // pred_check
      _
    $region7: #{net_forward.1} parent=1 // pred_check_branch
      %26 = sbr.rel (0) target = $region9
    $region8: #{net_forward.1} parent=1 // pred_region
      %s28 = ssub.s32 256, 256
      %29 = vsyncadd [#allocation5], %s28
      %s31 = sshll.u32 [#allocation4], 4
      %s32 = int_to_ptr.vmem [resolvable:$true] %s31
      %34 = dma.hbm_to_vmem [thread:$0]  %s1, 256, %s32, [#allocation5]
    $region9: #{net_forward.1} parent=1 // pred_fallthru
      _
    // Predicated region
    $region10: #{net_forward.1} parent=1 // pred_check
      _
    $region11: #{net_forward.1} parent=1 // pred_check_branch
      %36 = sbr.rel (0) target = $region13
    $region12: #{net_forward.1} parent=1 // pred_region
      _
    $region13: #{net_forward.1} parent=1 // pred_fallthru
      _
    // Predicated region
    $region14: #{net_forward.1} parent=1 // pred_check
      _
    $region15: #{net_forward.1} parent=1 // pred_check_branch
      %38 = sbr.rel (0) target = $region17
    $region16: #{net_forward.1} parent=1 // pred_region
      %s40 = ssub.s32 12288, 12288
      %41 = vsyncadd [#allocation5], %s40
      %s42 = sshll.u32 [#allocation6], 4
      %s43 = int_to_ptr.vmem [resolvable:$true] %s42
      %48 = dma.hbm_to_vmem [thread:$0]  %s3, 12288, %s43, [#allocation5], 192, 192, 12
    $region17: #{net_forward.1} parent=1 // pred_fallthru
      _
    // Predicated region
    $region18: #{net_forward.1} parent=1 // pred_check
      _
    $region19: #{net_forward.1} parent=1 // pred_check_branch
      %50 = sbr.rel (0) target = $region21
    $region20: #{net_forward.1} parent=1 // pred_region
      _
    $region21: #{net_forward.1} parent=1 // pred_fallthru
      _
    // Predicated region
    $region22: #{net_forward.1} parent=1 // pred_check
      _
    $region23: #{net_forward.1} parent=1 // pred_check_branch
      %52 = sbr.rel (0) target = $region25
    $region24: #{net_forward.1} parent=1 // pred_region
      %s54 = ssub.s32 3072, 3072
      %55 = vsyncadd [#allocation8], %s54
      %s56 = sshll.u32 [#allocation7], 4
      %s57 = int_to_ptr.vmem [resolvable:$true] %s56
      %62 = dma.hbm_to_vmem [thread:$0]  %s5, 3072, %s57, [#allocation8], 64, 64, 4
    $region25: #{net_forward.1} parent=1 // pred_fallthru
      _
    // Predicated region
    $region26: #{net_forward.1} parent=1 // pred_check
      _
    $region27: #{net_forward.1} parent=1 // pred_check_branch
      %64 = sbr.rel (0) target = $region29
    $region28: #{net_forward.1} parent=1 // pred_region
      _
    $region29: #{net_forward.1} parent=1 // pred_fallthru
      _
    // Predicated region
    $region30: #{net_forward.1} parent=1 // pred_check
      _
    $region31: #{net_forward.1} parent=1 // pred_check_branch
      %66 = sbr.rel (0) target = $region33
    $region32: #{net_forward.1} parent=1 // pred_region
      %67 = dma.done [#allocation3], 128
    $region33: #{net_forward.1} parent=1 // pred_fallthru
      _
    // Predicated region
    $region34: #{net_forward.1} parent=1 // pred_check
      _
    $region35: #{net_forward.1} parent=1 // pred_check_branch
      %69 = sbr.rel (0) target = $region37
    $region36: #{net_forward.1} parent=1 // pred_region
      %70 = dma.done [#allocation5], 256
    $region37: #{net_forward.1} parent=1 // pred_fallthru
      _
    // Predicated region
    $region38: #{net_forward.1} parent=1 // pred_check
      _
    $region39: #{net_forward.1} parent=1 // pred_check_branch
      %72 = sbr.rel (0) target = $region41
    $region40: #{net_forward.1} parent=1 // pred_region
      %73 = dma.done [#allocation5], 12288
    $region41: #{net_forward.1} parent=1 // pred_fallthru
      _
    // Predicated region
    $region42: #{net_forward.1} parent=1 // pred_check
      _
    $region43: #{net_forward.1} parent=1 // pred_check_branch
      %75 = sbr.rel (0) target = $region45
    $region44: #{net_forward.1} parent=1 // pred_region
      %76 = dma.done [#allocation8], 3072
    $region45: #{net_forward.1} parent=1 // pred_fallthru
      _
    %v78 = vld [vmem:[#allocation2] sm:$0xff]
    %v79 = vpack.c.bf16 %v78, %v78
    %v80 = vld [vmem:[#allocation4] sm:$0xff]
    %v81 = vld [vmem:[#allocation4 + $0x8] sm:$0xff]
    %v82 = vld [vmem:[%s2] sm:$0xf]
    %v84 = vlaneseq
    %v85 = vshrl.u32 %v84, 7
    %v86 = vsub.s32 0, %v85
    %v87 = vrot.slane %v82, %v86
    %v88 = vlaneseq
    %v89 = vshrl.u32 %v88, 7
    %v90 = vsub.s32 1, %v89
    %v91 = vrot.slane %v82, %v90
    %v92 = vlaneseq
    %v93 = vshrl.u32 %v92, 7
    %v94 = vsub.s32 2, %v93
    %v95 = vrot.slane %v82, %v94
    %v96 = vlaneseq
    %v97 = vshrl.u32 %v96, 7
    %v98 = vsub.s32 3, %v97
    %v99 = vrot.slane %v82, %v98
    %v106 = vunpack.c.l.b16 %v80
    %v107 = vunpack.c.h.b16 %v80
    %v108 = vunpack.c.l.b16 %v81
    %v109 = vunpack.c.h.b16 %v81
    %v110 = vpack.c.b16 %v106, %v106
    %v111 = vpack.c.b16 %v107, %v107
    %v112 = vpack.c.b16 %v108, %v108
    %v113 = vpack.c.b16 %v109, %v109
    %vm114 = vcmask 64512
    %v116 = vsel %vm114, %v79, 0
    %vm118 = vcmask 1043456
    %v120 = vsel %vm118, %v110, 0
    %v123 = vsel %vm118, %v111, 0
    %v126 = vsel %vm118, %v112, 0
    %v129 = vsel %vm118, %v113, 0
    %131 = vmatprep.subr.bf16.mxu0 %v123
    %132 = vmatpush1.bf16.msra.mxu0 %v120
    %133 = vmatprep.subr.bf16.mxu0 0
    %134 = vmatpush1.bf16.msra.mxu0 0
    %135 = vmatprep.subr.bf16.mxu0 0
    %136 = vmatpush1.bf16.msra.mxu0 0
    %137 = vmatprep.subr.bf16.mxu0 0
    %138 = vmatpush1.bf16.msra.mxu0 0
    %139 = vmatprep.subr.bf16.mxu0 0
    %140 = vmatpush1.bf16.msra.mxu0 0
    %141 = vmatprep.subr.bf16.mxu0 0
    %142 = vmatpush1.bf16.msra.mxu0 0
    %143 = vmatprep.subr.bf16.mxu0 0
    %144 = vmatpush1.bf16.msra.mxu0 0
    %145 = vmatprep.subr.bf16.mxu0 0
    %146 = vmatpush1.bf16.msra.mxu0 0
    %147 = vmatprep.subr.bf16.mxu0 0
    %148 = vmatpush1.bf16.msra.mxu0 0
    %149 = vmatprep.subr.bf16.mxu0 0
    %150 = vmatpush1.bf16.msra.mxu0 0
    %151 = vmatprep.subr.bf16.mxu0 0
    %152 = vmatpush1.bf16.msra.mxu0 0
    %153 = vmatprep.subr.bf16.mxu0 0
    %154 = vmatpush1.bf16.msra.mxu0 0
    %155 = vmatprep.subr.bf16.mxu0 0
    %156 = vmatpush1.bf16.msra.mxu0 0
    %157 = vmatprep.subr.bf16.mxu0 0
    %158 = vmatpush1.bf16.msra.mxu0 0
    %159 = vmatprep.subr.bf16.mxu0 0
    %160 = vmatpush1.bf16.msra.mxu0 0
    %161 = vmatprep.subr.bf16.mxu0 0
    %162 = vmatpush1.bf16.msra.mxu0 0
    %163 = vmatprep.mubr.bf16.mxu0 0
    %164 = vmatmul.mubr.bf16.gmra.mrb[0].mxu0 %v116
    %v165 = vpop.f32.mrb[0].mxu0
    %v166 = vadd.f32 %v87, %v165
    %v167 = vpop.f32.mrb[0].mxu0
    %v168 = vadd.f32 %v91, %v167
    %v169 = vpop.f32.mrb[0].mxu0
    %v170 = vpop.f32.mrb[0].mxu0
    %171 = vdwg.mxu0
    %172 = vmatprep.subr.bf16.mxu0 %v129
    %173 = vmatpush1.bf16.msra.mxu0 %v126
    %174 = vmatprep.subr.bf16.mxu0 0
    %175 = vmatpush1.bf16.msra.mxu0 0
    %176 = vmatprep.subr.bf16.mxu0 0
    %177 = vmatpush1.bf16.msra.mxu0 0
    %178 = vmatprep.subr.bf16.mxu0 0
    %179 = vmatpush1.bf16.msra.mxu0 0
    %180 = vmatprep.subr.bf16.mxu0 0
    %181 = vmatpush1.bf16.msra.mxu0 0
    %182 = vmatprep.subr.bf16.mxu0 0
    %183 = vmatpush1.bf16.msra.mxu0 0
    %184 = vmatprep.subr.bf16.mxu0 0
    %185 = vmatpush1.bf16.msra.mxu0 0
    %186 = vmatprep.subr.bf16.mxu0 0
    %187 = vmatpush1.bf16.msra.mxu0 0
    %188 = vmatprep.subr.bf16.mxu0 0
    %189 = vmatpush1.bf16.msra.mxu0 0
    %190 = vmatprep.subr.bf16.mxu0 0
    %191 = vmatpush1.bf16.msra.mxu0 0
    %192 = vmatprep.subr.bf16.mxu0 0
    %193 = vmatpush1.bf16.msra.mxu0 0
    %194 = vmatprep.subr.bf16.mxu0 0
    %195 = vmatpush1.bf16.msra.mxu0 0
    %196 = vmatprep.subr.bf16.mxu0 0
    %197 = vmatpush1.bf16.msra.mxu0 0
    %198 = vmatprep.subr.bf16.mxu0 0
    %199 = vmatpush1.bf16.msra.mxu0 0
    %200 = vmatprep.subr.bf16.mxu0 0
    %201 = vmatpush1.bf16.msra.mxu0 0
    %202 = vmatprep.subr.bf16.mxu0 0
    %203 = vmatpush1.bf16.msra.mxu0 0
    %204 = vmatprep.mubr.bf16.mxu0 0
    %205 = vmatmul.mubr.bf16.gmra.mrb[0].mxu0 %v116
    %v206 = vpop.f32.mrb[0].mxu0
    %v207 = vadd.f32 %v95, %v206
    %v208 = vpop.f32.mrb[0].mxu0
    %v209 = vadd.f32 %v99, %v208
    %v210 = vpop.f32.mrb[0].mxu0
    %v211 = vpop.f32.mrb[0].mxu0
    %212 = vdwg.mxu0
    %v213 = vmax.f32 %v166, 0.0
    %v214 = vmax.f32 %v168, 0.0
    %v215 = vmax.f32 %v207, 0.0
    %v216 = vmax.f32 %v209, 0.0
    %v217 = vpack.c.bf16 %v213, %v213
    %v218 = vpack.c.bf16 %v214, %v214
    %v219 = vpack.c.bf16 %v215, %v215
    %v220 = vpack.c.bf16 %v216, %v216
    %v221 = vld [vmem:[#allocation6] sm:$0xff]
    %v222 = vld [vmem:[#allocation6 + $0x8] sm:$0xf]
    %v223 = vld [vmem:[#allocation6 + $0xc] sm:$0xff]
    %v224 = vld [vmem:[#allocation6 + $0x14] sm:$0xf]
    %v225 = vld [vmem:[#allocation6 + $0x18] sm:$0xff]
    %v226 = vld [vmem:[#allocation6 + $0x20] sm:$0xf]
    %v227 = vld [vmem:[#allocation6 + $0x24] sm:$0xff]
    %v228 = vld [vmem:[#allocation6 + $0x2c] sm:$0xf]
    %v229 = vld [vmem:[#allocation6 + $0x30] sm:$0xff]
    %v230 = vld [vmem:[#allocation6 + $0x38] sm:$0xf]
    %v231 = vld [vmem:[#allocation6 + $0x3c] sm:$0xff]
    %v232 = vld [vmem:[#allocation6 + $0x44] sm:$0xf]
    %v233 = vld [vmem:[#allocation6 + $0x48] sm:$0xff]
    %v234 = vld [vmem:[#allocation6 + $0x50] sm:$0xf]
    %v235 = vld [vmem:[#allocation6 + $0x54] sm:$0xff]
    %v236 = vld [vmem:[#allocation6 + $0x5c] sm:$0xf]
    %v237 = vld [vmem:[#allocation6 + $0x60] sm:$0xff]
    %v238 = vld [vmem:[#allocation6 + $0x68] sm:$0xf]
    %v239 = vld [vmem:[#allocation6 + $0x6c] sm:$0xff]
    %v240 = vld [vmem:[#allocation6 + $0x74] sm:$0xf]
    %v241 = vld [vmem:[#allocation6 + $0x78] sm:$0xff]
    %v242 = vld [vmem:[#allocation6 + $0x80] sm:$0xf]
    %v243 = vld [vmem:[#allocation6 + $0x84] sm:$0xff]
    %v244 = vld [vmem:[#allocation6 + $0x8c] sm:$0xf]
    %v245 = vld [vmem:[#allocation6 + $0x90] sm:$0xff]
    %v246 = vld [vmem:[#allocation6 + $0x98] sm:$0xf]
    %v247 = vld [vmem:[#allocation6 + $0x9c] sm:$0xff]
    %v248 = vld [vmem:[#allocation6 + $0xa4] sm:$0xf]
    %v249 = vld [vmem:[#allocation6 + $0xa8] sm:$0xff]
    %v250 = vld [vmem:[#allocation6 + $0xb0] sm:$0xf]
    %v251 = vld [vmem:[#allocation6 + $0xb4] sm:$0xff]
    %v252 = vld [vmem:[#allocation6 + $0xbc] sm:$0xf]
    %v253 = vld [vmem:[#allocation6 + $0xc0] sm:$0xff]
    %v254 = vld [vmem:[#allocation6 + $0xc8] sm:$0xf]
    %v255 = vld [vmem:[#allocation6 + $0xcc] sm:$0xff]
    %v256 = vld [vmem:[#allocation6 + $0xd4] sm:$0xf]
    %v257 = vld [vmem:[#allocation6 + $0xd8] sm:$0xff]
    %v258 = vld [vmem:[#allocation6 + $0xe0] sm:$0xf]
    %v259 = vld [vmem:[#allocation6 + $0xe4] sm:$0xff]
    %v260 = vld [vmem:[#allocation6 + $0xec] sm:$0xf]
    %v261 = vld [vmem:[#allocation6 + $0xf0] sm:$0xff]
    %v262 = vld [vmem:[#allocation6 + $0xf8] sm:$0xf]
    %v263 = vld [vmem:[#allocation6 + $0xfc] sm:$0xff]
    %v264 = vld [vmem:[#allocation6 + $0x104] sm:$0xf]
    %v265 = vld [vmem:[#allocation6 + $0x108] sm:$0xff]
    %v266 = vld [vmem:[#allocation6 + $0x110] sm:$0xf]
    %v267 = vld [vmem:[#allocation6 + $0x114] sm:$0xff]
    %v268 = vld [vmem:[#allocation6 + $0x11c] sm:$0xf]
    %v269 = vld [vmem:[#allocation6 + $0x120] sm:$0xff]
    %v270 = vld [vmem:[#allocation6 + $0x128] sm:$0xf]
    %v271 = vld [vmem:[#allocation6 + $0x12c] sm:$0xff]
    %v272 = vld [vmem:[#allocation6 + $0x134] sm:$0xf]
    %v273 = vld [vmem:[#allocation6 + $0x138] sm:$0xff]
    %v274 = vld [vmem:[#allocation6 + $0x140] sm:$0xf]
    %v275 = vld [vmem:[#allocation6 + $0x144] sm:$0xff]
    %v276 = vld [vmem:[#allocation6 + $0x14c] sm:$0xf]
    %v277 = vld [vmem:[#allocation6 + $0x150] sm:$0xff]
    %v278 = vld [vmem:[#allocation6 + $0x158] sm:$0xf]
    %v279 = vld [vmem:[#allocation6 + $0x15c] sm:$0xff]
    %v280 = vld [vmem:[#allocation6 + $0x164] sm:$0xf]
    %v281 = vld [vmem:[#allocation6 + $0x168] sm:$0xff]
    %v282 = vld [vmem:[#allocation6 + $0x170] sm:$0xf]
    %v283 = vld [vmem:[#allocation6 + $0x174] sm:$0xff]
    %v284 = vld [vmem:[#allocation6 + $0x17c] sm:$0xf]
    %v285 = vld [vmem:[#allocation6 + $0x180] sm:$0xff]
    %v286 = vld [vmem:[#allocation6 + $0x188] sm:$0xf]
    %v287 = vld [vmem:[#allocation6 + $0x18c] sm:$0xff]
    %v288 = vld [vmem:[#allocation6 + $0x194] sm:$0xf]
    %v289 = vld [vmem:[#allocation6 + $0x198] sm:$0xff]
    %v290 = vld [vmem:[#allocation6 + $0x1a0] sm:$0xf]
    %v291 = vld [vmem:[#allocation6 + $0x1a4] sm:$0xff]
    %v292 = vld [vmem:[#allocation6 + $0x1ac] sm:$0xf]
    %v293 = vld [vmem:[#allocation6 + $0x1b0] sm:$0xff]
    %v294 = vld [vmem:[#allocation6 + $0x1b8] sm:$0xf]
    %v295 = vld [vmem:[#allocation6 + $0x1bc] sm:$0xff]
    %v296 = vld [vmem:[#allocation6 + $0x1c4] sm:$0xf]
    %v297 = vld [vmem:[#allocation6 + $0x1c8] sm:$0xff]
    %v298 = vld [vmem:[#allocation6 + $0x1d0] sm:$0xf]
    %v299 = vld [vmem:[#allocation6 + $0x1d4] sm:$0xff]
    %v300 = vld [vmem:[#allocation6 + $0x1dc] sm:$0xf]
    %v301 = vld [vmem:[#allocation6 + $0x1e0] sm:$0xff]
    %v302 = vld [vmem:[#allocation6 + $0x1e8] sm:$0xf]
    %v303 = vld [vmem:[#allocation6 + $0x1ec] sm:$0xff]
    %v304 = vld [vmem:[#allocation6 + $0x1f4] sm:$0xf]
    %v305 = vld [vmem:[#allocation6 + $0x1f8] sm:$0xff]
    %v306 = vld [vmem:[#allocation6 + $0x200] sm:$0xf]
    %v307 = vld [vmem:[#allocation6 + $0x204] sm:$0xff]
    %v308 = vld [vmem:[#allocation6 + $0x20c] sm:$0xf]
    %v309 = vld [vmem:[#allocation6 + $0x210] sm:$0xff]
    %v310 = vld [vmem:[#allocation6 + $0x218] sm:$0xf]
    %v311 = vld [vmem:[#allocation6 + $0x21c] sm:$0xff]
    %v312 = vld [vmem:[#allocation6 + $0x224] sm:$0xf]
    %v313 = vld [vmem:[#allocation6 + $0x228] sm:$0xff]
    %v314 = vld [vmem:[#allocation6 + $0x230] sm:$0xf]
    %v315 = vld [vmem:[#allocation6 + $0x234] sm:$0xff]
    %v316 = vld [vmem:[#allocation6 + $0x23c] sm:$0xf]
    %v317 = vld [vmem:[#allocation6 + $0x240] sm:$0xff]
    %v318 = vld [vmem:[#allocation6 + $0x248] sm:$0xf]
    %v319 = vld [vmem:[#allocation6 + $0x24c] sm:$0xff]
    %v320 = vld [vmem:[#allocation6 + $0x254] sm:$0xf]
    %v321 = vld [vmem:[#allocation6 + $0x258] sm:$0xff]
    %v322 = vld [vmem:[#allocation6 + $0x260] sm:$0xf]
    %v323 = vld [vmem:[#allocation6 + $0x264] sm:$0xff]
    %v324 = vld [vmem:[#allocation6 + $0x26c] sm:$0xf]
    %v325 = vld [vmem:[#allocation6 + $0x270] sm:$0xff]
    %v326 = vld [vmem:[#allocation6 + $0x278] sm:$0xf]
    %v327 = vld [vmem:[#allocation6 + $0x27c] sm:$0xff]
    %v328 = vld [vmem:[#allocation6 + $0x284] sm:$0xf]
    %v329 = vld [vmem:[#allocation6 + $0x288] sm:$0xff]
    %v330 = vld [vmem:[#allocation6 + $0x290] sm:$0xf]
    %v331 = vld [vmem:[#allocation6 + $0x294] sm:$0xff]
    %v332 = vld [vmem:[#allocation6 + $0x29c] sm:$0xf]
    %v333 = vld [vmem:[#allocation6 + $0x2a0] sm:$0xff]
    %v334 = vld [vmem:[#allocation6 + $0x2a8] sm:$0xf]
    %v335 = vld [vmem:[#allocation6 + $0x2ac] sm:$0xff]
    %v336 = vld [vmem:[#allocation6 + $0x2b4] sm:$0xf]
    %v337 = vld [vmem:[#allocation6 + $0x2b8] sm:$0xff]
    %v338 = vld [vmem:[#allocation6 + $0x2c0] sm:$0xf]
    %v339 = vld [vmem:[#allocation6 + $0x2c4] sm:$0xff]
    %v340 = vld [vmem:[#allocation6 + $0x2cc] sm:$0xf]
    %v341 = vld [vmem:[#allocation6 + $0x2d0] sm:$0xff]
    %v342 = vld [vmem:[#allocation6 + $0x2d8] sm:$0xf]
    %v343 = vld [vmem:[#allocation6 + $0x2dc] sm:$0xff]
    %v344 = vld [vmem:[#allocation6 + $0x2e4] sm:$0xf]
    %v345 = vld [vmem:[#allocation6 + $0x2e8] sm:$0xff]
    %v346 = vld [vmem:[#allocation6 + $0x2f0] sm:$0xf]
    %v347 = vld [vmem:[#allocation6 + $0x2f4] sm:$0xff]
    %v348 = vld [vmem:[#allocation6 + $0x2fc] sm:$0xf]
    %v349 = vld [vmem:[%s4] sm:$0x7]
    %v351 = vlaneseq
    %v352 = vshrl.u32 %v351, 7
    %v353 = vsub.s32 0, %v352
    %v354 = vrot.slane %v349, %v353
    %v355 = vlaneseq
    %v356 = vshrl.u32 %v355, 7
    %v357 = vsub.s32 1, %v356
    %v358 = vrot.slane %v349, %v357
    %v359 = vlaneseq
    %v360 = vshrl.u32 %v359, 7
    %v361 = vsub.s32 2, %v360
    %v362 = vrot.slane %v349, %v361
    %v494 = vunpack.c.l.b16 %v221
    %v495 = vunpack.c.h.b16 %v221
    %v496 = vunpack.c.l.b16 %v222
    %v497 = vunpack.c.l.b16 %v223
    %v498 = vunpack.c.h.b16 %v223
    %v499 = vunpack.c.l.b16 %v224
    %v500 = vunpack.c.l.b16 %v225
    %v501 = vunpack.c.h.b16 %v225
    %v502 = vunpack.c.l.b16 %v226
    %v503 = vunpack.c.l.b16 %v227
    %v504 = vunpack.c.h.b16 %v227
    %v505 = vunpack.c.l.b16 %v228
    %v506 = vunpack.c.l.b16 %v229
    %v507 = vunpack.c.h.b16 %v229
    %v508 = vunpack.c.l.b16 %v230
    %v509 = vunpack.c.l.b16 %v231
    %v510 = vunpack.c.h.b16 %v231
    %v511 = vunpack.c.l.b16 %v232
    %v512 = vunpack.c.l.b16 %v233
    %v513 = vunpack.c.h.b16 %v233
    %v514 = vunpack.c.l.b16 %v234
    %v515 = vunpack.c.l.b16 %v235
    %v516 = vunpack.c.h.b16 %v235
    %v517 = vunpack.c.l.b16 %v236
    %v518 = vunpack.c.l.b16 %v237
    %v519 = vunpack.c.h.b16 %v237
    %v520 = vunpack.c.l.b16 %v238
    %v521 = vunpack.c.l.b16 %v239
    %v522 = vunpack.c.h.b16 %v239
    %v523 = vunpack.c.l.b16 %v240
    %v524 = vunpack.c.l.b16 %v241
    %v525 = vunpack.c.h.b16 %v241
    %v526 = vunpack.c.l.b16 %v242
    %v527 = vunpack.c.l.b16 %v243
    %v528 = vunpack.c.h.b16 %v243
    %v529 = vunpack.c.l.b16 %v244
    %v530 = vunpack.c.l.b16 %v245
    %v531 = vunpack.c.h.b16 %v245
    %v532 = vunpack.c.l.b16 %v246
    %v533 = vunpack.c.l.b16 %v247
    %v534 = vunpack.c.h.b16 %v247
    %v535 = vunpack.c.l.b16 %v248
    %v536 = vunpack.c.l.b16 %v249
    %v537 = vunpack.c.h.b16 %v249
    %v538 = vunpack.c.l.b16 %v250
    %v539 = vunpack.c.l.b16 %v251
    %v540 = vunpack.c.h.b16 %v251
    %v541 = vunpack.c.l.b16 %v252
    %v542 = vunpack.c.l.b16 %v253
    %v543 = vunpack.c.h.b16 %v253
    %v544 = vunpack.c.l.b16 %v254
    %v545 = vunpack.c.l.b16 %v255
    %v546 = vunpack.c.h.b16 %v255
    %v547 = vunpack.c.l.b16 %v256
    %v548 = vunpack.c.l.b16 %v257
    %v549 = vunpack.c.h.b16 %v257
    %v550 = vunpack.c.l.b16 %v258
    %v551 = vunpack.c.l.b16 %v259
    %v552 = vunpack.c.h.b16 %v259
    %v553 = vunpack.c.l.b16 %v260
    %v554 = vunpack.c.l.b16 %v261
    %v555 = vunpack.c.h.b16 %v261
    %v556 = vunpack.c.l.b16 %v262
    %v557 = vunpack.c.l.b16 %v263
    %v558 = vunpack.c.h.b16 %v263
    %v559 = vunpack.c.l.b16 %v264
    %v560 = vunpack.c.l.b16 %v265
    %v561 = vunpack.c.h.b16 %v265
    %v562 = vunpack.c.l.b16 %v266
    %v563 = vunpack.c.l.b16 %v267
    %v564 = vunpack.c.h.b16 %v267
    %v565 = vunpack.c.l.b16 %v268
    %v566 = vunpack.c.l.b16 %v269
    %v567 = vunpack.c.h.b16 %v269
    %v568 = vunpack.c.l.b16 %v270
    %v569 = vunpack.c.l.b16 %v271
    %v570 = vunpack.c.h.b16 %v271
    %v571 = vunpack.c.l.b16 %v272
    %v572 = vunpack.c.l.b16 %v273
    %v573 = vunpack.c.h.b16 %v273
    %v574 = vunpack.c.l.b16 %v274
    %v575 = vunpack.c.l.b16 %v275
    %v576 = vunpack.c.h.b16 %v275
    %v577 = vunpack.c.l.b16 %v276
    %v578 = vunpack.c.l.b16 %v277
    %v579 = vunpack.c.h.b16 %v277
    %v580 = vunpack.c.l.b16 %v278
    %v581 = vunpack.c.l.b16 %v279
    %v582 = vunpack.c.h.b16 %v279
    %v583 = vunpack.c.l.b16 %v280
    %v584 = vunpack.c.l.b16 %v281
    %v585 = vunpack.c.h.b16 %v281
    %v586 = vunpack.c.l.b16 %v282
    %v587 = vunpack.c.l.b16 %v283
    %v588 = vunpack.c.h.b16 %v283
    %v589 = vunpack.c.l.b16 %v284
    %v590 = vunpack.c.l.b16 %v285
    %v591 = vunpack.c.h.b16 %v285
    %v592 = vunpack.c.l.b16 %v286
    %v593 = vunpack.c.l.b16 %v287
    %v594 = vunpack.c.h.b16 %v287
    %v595 = vunpack.c.l.b16 %v288
    %v596 = vunpack.c.l.b16 %v289
    %v597 = vunpack.c.h.b16 %v289
    %v598 = vunpack.c.l.b16 %v290
    %v599 = vunpack.c.l.b16 %v291
    %v600 = vunpack.c.h.b16 %v291
    %v601 = vunpack.c.l.b16 %v292
    %v602 = vunpack.c.l.b16 %v293
    %v603 = vunpack.c.h.b16 %v293
    %v604 = vunpack.c.l.b16 %v294
    %v605 = vunpack.c.l.b16 %v295
    %v606 = vunpack.c.h.b16 %v295
    %v607 = vunpack.c.l.b16 %v296
    %v608 = vunpack.c.l.b16 %v297
    %v609 = vunpack.c.h.b16 %v297
    %v610 = vunpack.c.l.b16 %v298
    %v611 = vunpack.c.l.b16 %v299
    %v612 = vunpack.c.h.b16 %v299
    %v613 = vunpack.c.l.b16 %v300
    %v614 = vunpack.c.l.b16 %v301
    %v615 = vunpack.c.h.b16 %v301
    %v616 = vunpack.c.l.b16 %v302
    %v617 = vunpack.c.l.b16 %v303
    %v618 = vunpack.c.h.b16 %v303
    %v619 = vunpack.c.l.b16 %v304
    %v620 = vunpack.c.l.b16 %v305
    %v621 = vunpack.c.h.b16 %v305
    %v622 = vunpack.c.l.b16 %v306
    %v623 = vunpack.c.l.b16 %v307
    %v624 = vunpack.c.h.b16 %v307
    %v625 = vunpack.c.l.b16 %v308
    %v626 = vunpack.c.l.b16 %v309
    %v627 = vunpack.c.h.b16 %v309
    %v628 = vunpack.c.l.b16 %v310
    %v629 = vunpack.c.l.b16 %v311
    %v630 = vunpack.c.h.b16 %v311
    %v631 = vunpack.c.l.b16 %v312
    %v632 = vunpack.c.l.b16 %v313
    %v633 = vunpack.c.h.b16 %v313
    %v634 = vunpack.c.l.b16 %v314
    %v635 = vunpack.c.l.b16 %v315
    %v636 = vunpack.c.h.b16 %v315
    %v637 = vunpack.c.l.b16 %v316
    %v638 = vunpack.c.l.b16 %v317
    %v639 = vunpack.c.h.b16 %v317
    %v640 = vunpack.c.l.b16 %v318
    %v641 = vunpack.c.l.b16 %v319
    %v642 = vunpack.c.h.b16 %v319
    %v643 = vunpack.c.l.b16 %v320
    %v644 = vunpack.c.l.b16 %v321
    %v645 = vunpack.c.h.b16 %v321
    %v646 = vunpack.c.l.b16 %v322
    %v647 = vunpack.c.l.b16 %v323
    %v648 = vunpack.c.h.b16 %v323
    %v649 = vunpack.c.l.b16 %v324
    %v650 = vunpack.c.l.b16 %v325
    %v651 = vunpack.c.h.b16 %v325
    %v652 = vunpack.c.l.b16 %v326
    %v653 = vunpack.c.l.b16 %v327
    %v654 = vunpack.c.h.b16 %v327
    %v655 = vunpack.c.l.b16 %v328
    %v656 = vunpack.c.l.b16 %v329
    %v657 = vunpack.c.h.b16 %v329
    %v658 = vunpack.c.l.b16 %v330
    %v659 = vunpack.c.l.b16 %v331
    %v660 = vunpack.c.h.b16 %v331
    %v661 = vunpack.c.l.b16 %v332
    %v662 = vunpack.c.l.b16 %v333
    %v663 = vunpack.c.h.b16 %v333
    %v664 = vunpack.c.l.b16 %v334
    %v665 = vunpack.c.l.b16 %v335
    %v666 = vunpack.c.h.b16 %v335
    %v667 = vunpack.c.l.b16 %v336
    %v668 = vunpack.c.l.b16 %v337
    %v669 = vunpack.c.h.b16 %v337
    %v670 = vunpack.c.l.b16 %v338
    %v671 = vunpack.c.l.b16 %v339
    %v672 = vunpack.c.h.b16 %v339
    %v673 = vunpack.c.l.b16 %v340
    %v674 = vunpack.c.l.b16 %v341
    %v675 = vunpack.c.h.b16 %v341
    %v676 = vunpack.c.l.b16 %v342
    %v677 = vunpack.c.l.b16 %v343
    %v678 = vunpack.c.h.b16 %v343
    %v679 = vunpack.c.l.b16 %v344
    %v680 = vunpack.c.l.b16 %v345
    %v681 = vunpack.c.h.b16 %v345
    %v682 = vunpack.c.l.b16 %v346
    %v683 = vunpack.c.l.b16 %v347
    %v684 = vunpack.c.h.b16 %v347
    %v685 = vunpack.c.l.b16 %v348
    %v686 = vpack.c.b16 %v497, %v494
    %v687 = vpack.c.b16 %v498, %v495
    %v688 = vpack.c.b16 %v499, %v496
    %v689 = vpack.c.b16 %v503, %v500
    %v690 = vpack.c.b16 %v504, %v501
    %v691 = vpack.c.b16 %v505, %v502
    %v692 = vpack.c.b16 %v509, %v506
    %v693 = vpack.c.b16 %v510, %v507
    %v694 = vpack.c.b16 %v511, %v508
    %v695 = vpack.c.b16 %v515, %v512
    %v696 = vpack.c.b16 %v516, %v513
    %v697 = vpack.c.b16 %v517, %v514
    %v698 = vpack.c.b16 %v521, %v518
    %v699 = vpack.c.b16 %v522, %v519
    %v700 = vpack.c.b16 %v523, %v520
    %v701 = vpack.c.b16 %v527, %v524
    %v702 = vpack.c.b16 %v528, %v525
    %v703 = vpack.c.b16 %v529, %v526
    %v704 = vpack.c.b16 %v533, %v530
    %v705 = vpack.c.b16 %v534, %v531
    %v706 = vpack.c.b16 %v535, %v532
    %v707 = vpack.c.b16 %v539, %v536
    %v708 = vpack.c.b16 %v540, %v537
    %v709 = vpack.c.b16 %v541, %v538
    %v710 = vpack.c.b16 %v545, %v542
    %v711 = vpack.c.b16 %v546, %v543
    %v712 = vpack.c.b16 %v547, %v544
    %v713 = vpack.c.b16 %v551, %v548
    %v714 = vpack.c.b16 %v552, %v549
    %v715 = vpack.c.b16 %v553, %v550
    %v716 = vpack.c.b16 %v557, %v554
    %v717 = vpack.c.b16 %v558, %v555
    %v718 = vpack.c.b16 %v559, %v556
    %v719 = vpack.c.b16 %v563, %v560
    %v720 = vpack.c.b16 %v564, %v561
    %v721 = vpack.c.b16 %v565, %v562
    %v722 = vpack.c.b16 %v569, %v566
    %v723 = vpack.c.b16 %v570, %v567
    %v724 = vpack.c.b16 %v571, %v568
    %v725 = vpack.c.b16 %v575, %v572
    %v726 = vpack.c.b16 %v576, %v573
    %v727 = vpack.c.b16 %v577, %v574
    %v728 = vpack.c.b16 %v581, %v578
    %v729 = vpack.c.b16 %v582, %v579
    %v730 = vpack.c.b16 %v583, %v580
    %v731 = vpack.c.b16 %v587, %v584
    %v732 = vpack.c.b16 %v588, %v585
    %v733 = vpack.c.b16 %v589, %v586
    %v734 = vpack.c.b16 %v593, %v590
    %v735 = vpack.c.b16 %v594, %v591
    %v736 = vpack.c.b16 %v595, %v592
    %v737 = vpack.c.b16 %v599, %v596
    %v738 = vpack.c.b16 %v600, %v597
    %v739 = vpack.c.b16 %v601, %v598
    %v740 = vpack.c.b16 %v605, %v602
    %v741 = vpack.c.b16 %v606, %v603
    %v742 = vpack.c.b16 %v607, %v604
    %v743 = vpack.c.b16 %v611, %v608
    %v744 = vpack.c.b16 %v612, %v609
    %v745 = vpack.c.b16 %v613, %v610
    %v746 = vpack.c.b16 %v617, %v614
    %v747 = vpack.c.b16 %v618, %v615
    %v748 = vpack.c.b16 %v619, %v616
    %v749 = vpack.c.b16 %v623, %v620
    %v750 = vpack.c.b16 %v624, %v621
    %v751 = vpack.c.b16 %v625, %v622
    %v752 = vpack.c.b16 %v629, %v626
    %v753 = vpack.c.b16 %v630, %v627
    %v754 = vpack.c.b16 %v631, %v628
    %v755 = vpack.c.b16 %v635, %v632
    %v756 = vpack.c.b16 %v636, %v633
    %v757 = vpack.c.b16 %v637, %v634
    %v758 = vpack.c.b16 %v641, %v638
    %v759 = vpack.c.b16 %v642, %v639
    %v760 = vpack.c.b16 %v643, %v640
    %v761 = vpack.c.b16 %v647, %v644
    %v762 = vpack.c.b16 %v648, %v645
    %v763 = vpack.c.b16 %v649, %v646
    %v764 = vpack.c.b16 %v653, %v650
    %v765 = vpack.c.b16 %v654, %v651
    %v766 = vpack.c.b16 %v655, %v652
    %v767 = vpack.c.b16 %v659, %v656
    %v768 = vpack.c.b16 %v660, %v657
    %v769 = vpack.c.b16 %v661, %v658
    %v770 = vpack.c.b16 %v665, %v662
    %v771 = vpack.c.b16 %v666, %v663
    %v772 = vpack.c.b16 %v667, %v664
    %v773 = vpack.c.b16 %v671, %v668
    %v774 = vpack.c.b16 %v672, %v669
    %v775 = vpack.c.b16 %v673, %v670
    %v776 = vpack.c.b16 %v677, %v674
    %v777 = vpack.c.b16 %v678, %v675
    %v778 = vpack.c.b16 %v679, %v676
    %v779 = vpack.c.b16 %v683, %v680
    %v780 = vpack.c.b16 %v684, %v681
    %v781 = vpack.c.b16 %v685, %v682
    %878 = vmatprep.subr.bf16.mxu0 %v687
    %879 = vmatpush1.bf16.msra.mxu0 %v686
    %880 = vmatprep.subr.bf16.mxu0 %v690
    %881 = vmatpush1.bf16.msra.mxu0 %v689
    %882 = vmatprep.subr.bf16.mxu0 %v693
    %883 = vmatpush1.bf16.msra.mxu0 %v692
    %884 = vmatprep.subr.bf16.mxu0 %v696
    %885 = vmatpush1.bf16.msra.mxu0 %v695
    %886 = vmatprep.subr.bf16.mxu0 %v699
    %887 = vmatpush1.bf16.msra.mxu0 %v698
    %888 = vmatprep.subr.bf16.mxu0 %v702
    %889 = vmatpush1.bf16.msra.mxu0 %v701
    %890 = vmatprep.subr.bf16.mxu0 %v705
    %891 = vmatpush1.bf16.msra.mxu0 %v704
    %892 = vmatprep.subr.bf16.mxu0 %v708
    %893 = vmatpush1.bf16.msra.mxu0 %v707
    %894 = vmatprep.subr.bf16.mxu0 %v711
    %895 = vmatpush1.bf16.msra.mxu0 %v710
    %896 = vmatprep.subr.bf16.mxu0 %v714
    %897 = vmatpush1.bf16.msra.mxu0 %v713
    %898 = vmatprep.subr.bf16.mxu0 %v717
    %899 = vmatpush1.bf16.msra.mxu0 %v716
    %900 = vmatprep.subr.bf16.mxu0 %v720
    %901 = vmatpush1.bf16.msra.mxu0 %v719
    %902 = vmatprep.subr.bf16.mxu0 %v723
    %903 = vmatpush1.bf16.msra.mxu0 %v722
    %904 = vmatprep.subr.bf16.mxu0 %v726
    %905 = vmatpush1.bf16.msra.mxu0 %v725
    %906 = vmatprep.subr.bf16.mxu0 %v729
    %907 = vmatpush1.bf16.msra.mxu0 %v728
    %908 = vmatprep.subr.bf16.mxu0 %v732
    %909 = vmatpush1.bf16.msra.mxu0 %v731
    %910 = vmatprep.mubr.bf16.mxu0 %v218
    %911 = vmatmul.mubr.bf16.gmra.mrb[0].mxu0 %v217
    %v912 = vpop.f32.mrb[0].mxu0
    %v913 = vadd.f32 %v354, %v912
    %v914 = vpop.f32.mrb[0].mxu0
    %v915 = vadd.f32 %v358, %v914
    %v916 = vpop.f32.mrb[0].mxu0
    %v917 = vpop.f32.mrb[0].mxu0
    %918 = vdwg.mxu0
    %919 = vmatprep.subr.bf16.mxu0 %v735
    %920 = vmatpush1.bf16.msra.mxu0 %v734
    %921 = vmatprep.subr.bf16.mxu0 %v738
    %922 = vmatpush1.bf16.msra.mxu0 %v737
    %923 = vmatprep.subr.bf16.mxu0 %v741
    %924 = vmatpush1.bf16.msra.mxu0 %v740
    %925 = vmatprep.subr.bf16.mxu0 %v744
    %926 = vmatpush1.bf16.msra.mxu0 %v743
    %927 = vmatprep.subr.bf16.mxu0 %v747
    %928 = vmatpush1.bf16.msra.mxu0 %v746
    %929 = vmatprep.subr.bf16.mxu0 %v750
    %930 = vmatpush1.bf16.msra.mxu0 %v749
    %931 = vmatprep.subr.bf16.mxu0 %v753
    %932 = vmatpush1.bf16.msra.mxu0 %v752
    %933 = vmatprep.subr.bf16.mxu0 %v756
    %934 = vmatpush1.bf16.msra.mxu0 %v755
    %935 = vmatprep.subr.bf16.mxu0 %v759
    %936 = vmatpush1.bf16.msra.mxu0 %v758
    %937 = vmatprep.subr.bf16.mxu0 %v762
    %938 = vmatpush1.bf16.msra.mxu0 %v761
    %939 = vmatprep.subr.bf16.mxu0 %v765
    %940 = vmatpush1.bf16.msra.mxu0 %v764
    %941 = vmatprep.subr.bf16.mxu0 %v768
    %942 = vmatpush1.bf16.msra.mxu0 %v767
    %943 = vmatprep.subr.bf16.mxu0 %v771
    %944 = vmatpush1.bf16.msra.mxu0 %v770
    %945 = vmatprep.subr.bf16.mxu0 %v774
    %946 = vmatpush1.bf16.msra.mxu0 %v773
    %947 = vmatprep.subr.bf16.mxu0 %v777
    %948 = vmatpush1.bf16.msra.mxu0 %v776
    %949 = vmatprep.subr.bf16.mxu0 %v780
    %950 = vmatpush1.bf16.msra.mxu0 %v779
    %951 = vmatprep.mubr.bf16.mxu0 %v220
    %952 = vmatmul.mubr.bf16.gmra.mrb[0].mxu0 %v219
    %v953 = vpop.f32.mrb[0].mxu0
    %v954 = vadd.f32 %v913, %v953
    %v955 = vpop.f32.mrb[0].mxu0
    %v956 = vadd.f32 %v915, %v955
    %v957 = vpop.f32.mrb[0].mxu0
    %v958 = vpop.f32.mrb[0].mxu0
    %959 = vdwg.mxu0
    %960 = vmatprep.subr.bf16.mxu0 0
    %961 = vmatpush1.bf16.msra.mxu0 %v688
    %962 = vmatprep.subr.bf16.mxu0 0
    %963 = vmatpush1.bf16.msra.mxu0 %v691
    %964 = vmatprep.subr.bf16.mxu0 0
    %965 = vmatpush1.bf16.msra.mxu0 %v694
    %966 = vmatprep.subr.bf16.mxu0 0
    %967 = vmatpush1.bf16.msra.mxu0 %v697
    %968 = vmatprep.subr.bf16.mxu0 0
    %969 = vmatpush1.bf16.msra.mxu0 %v700
    %970 = vmatprep.subr.bf16.mxu0 0
    %971 = vmatpush1.bf16.msra.mxu0 %v703
    %972 = vmatprep.subr.bf16.mxu0 0
    %973 = vmatpush1.bf16.msra.mxu0 %v706
    %974 = vmatprep.subr.bf16.mxu0 0
    %975 = vmatpush1.bf16.msra.mxu0 %v709
    %976 = vmatprep.subr.bf16.mxu0 0
    %977 = vmatpush1.bf16.msra.mxu0 %v712
    %978 = vmatprep.subr.bf16.mxu0 0
    %979 = vmatpush1.bf16.msra.mxu0 %v715
    %980 = vmatprep.subr.bf16.mxu0 0
    %981 = vmatpush1.bf16.msra.mxu0 %v718
    %982 = vmatprep.subr.bf16.mxu0 0
    %983 = vmatpush1.bf16.msra.mxu0 %v721
    %984 = vmatprep.subr.bf16.mxu0 0
    %985 = vmatpush1.bf16.msra.mxu0 %v724
    %986 = vmatprep.subr.bf16.mxu0 0
    %987 = vmatpush1.bf16.msra.mxu0 %v727
    %988 = vmatprep.subr.bf16.mxu0 0
    %989 = vmatpush1.bf16.msra.mxu0 %v730
    %990 = vmatprep.subr.bf16.mxu0 0
    %991 = vmatpush1.bf16.msra.mxu0 %v733
    %992 = vmatprep.mubr.bf16.mxu0 %v218
    %993 = vmatmul.mubr.bf16.gmra.mrb[0].mxu0 %v217
    %v994 = vpop.f32.mrb[0].mxu0
    %v995 = vadd.f32 %v362, %v994
    %v996 = vpop.f32.mrb[0].mxu0
    %v997 = vpop.f32.mrb[0].mxu0
    %v998 = vpop.f32.mrb[0].mxu0
    %999 = vdwg.mxu0
    %1000 = vmatprep.subr.bf16.mxu0 0
    %1001 = vmatpush1.bf16.msra.mxu0 %v736
    %1002 = vmatprep.subr.bf16.mxu0 0
    %1003 = vmatpush1.bf16.msra.mxu0 %v739
    %1004 = vmatprep.subr.bf16.mxu0 0
    %1005 = vmatpush1.bf16.msra.mxu0 %v742
    %1006 = vmatprep.subr.bf16.mxu0 0
    %1007 = vmatpush1.bf16.msra.mxu0 %v745
    %1008 = vmatprep.subr.bf16.mxu0 0
    %1009 = vmatpush1.bf16.msra.mxu0 %v748
    %1010 = vmatprep.subr.bf16.mxu0 0
    %1011 = vmatpush1.bf16.msra.mxu0 %v751
    %1012 = vmatprep.subr.bf16.mxu0 0
    %1013 = vmatpush1.bf16.msra.mxu0 %v754
    %1014 = vmatprep.subr.bf16.mxu0 0
    %1015 = vmatpush1.bf16.msra.mxu0 %v757
    %1016 = vmatprep.subr.bf16.mxu0 0
    %1017 = vmatpush1.bf16.msra.mxu0 %v760
    %1018 = vmatprep.subr.bf16.mxu0 0
    %1019 = vmatpush1.bf16.msra.mxu0 %v763
    %1020 = vmatprep.subr.bf16.mxu0 0
    %1021 = vmatpush1.bf16.msra.mxu0 %v766
    %1022 = vmatprep.subr.bf16.mxu0 0
    %1023 = vmatpush1.bf16.msra.mxu0 %v769
    %1024 = vmatprep.subr.bf16.mxu0 0
    %1025 = vmatpush1.bf16.msra.mxu0 %v772
    %1026 = vmatprep.subr.bf16.mxu0 0
    %1027 = vmatpush1.bf16.msra.mxu0 %v775
    %1028 = vmatprep.subr.bf16.mxu0 0
    %1029 = vmatpush1.bf16.msra.mxu0 %v778
    %1030 = vmatprep.subr.bf16.mxu0 0
    %1031 = vmatpush1.bf16.msra.mxu0 %v781
    %1032 = vmatprep.mubr.bf16.mxu0 %v220
    %1033 = vmatmul.mubr.bf16.gmra.mrb[0].mxu0 %v219
    %v1034 = vpop.f32.mrb[0].mxu0
    %v1035 = vadd.f32 %v995, %v1034
    %v1036 = vpop.f32.mrb[0].mxu0
    %v1037 = vpop.f32.mrb[0].mxu0
    %v1038 = vpop.f32.mrb[0].mxu0
    %1039 = vdwg.mxu0
    %v1040 = vmax.f32 %v954, 0.0
    %v1041 = vmax.f32 %v956, 0.0
    %v1042 = vmax.f32 %v1035, 0.0
    %v1043 = vpack.c.bf16 %v1040, %v1040
    %v1044 = vpack.c.bf16 %v1041, %v1041
    %v1045 = vpack.c.bf16 %v1042, %v1042
    %v1046 = vld [vmem:[#allocation7] sm:$0xf]
    %v1047 = vld [vmem:[#allocation7 + $0x4] sm:$0xf]
    %v1048 = vld [vmem:[#allocation7 + $0x8] sm:$0xf]
    %v1049 = vld [vmem:[#allocation7 + $0xc] sm:$0xf]
    %v1050 = vld [vmem:[#allocation7 + $0x10] sm:$0xf]
    %v1051 = vld [vmem:[#allocation7 + $0x14] sm:$0xf]
    %v1052 = vld [vmem:[#allocation7 + $0x18] sm:$0xf]
    %v1053 = vld [vmem:[#allocation7 + $0x1c] sm:$0xf]
    %v1054 = vld [vmem:[#allocation7 + $0x20] sm:$0xf]
    %v1055 = vld [vmem:[#allocation7 + $0x24] sm:$0xf]
    %v1056 = vld [vmem:[#allocation7 + $0x28] sm:$0xf]
    %v1057 = vld [vmem:[#allocation7 + $0x2c] sm:$0xf]
    %v1058 = vld [vmem:[#allocation7 + $0x30] sm:$0xf]
    %v1059 = vld [vmem:[#allocation7 + $0x34] sm:$0xf]
    %v1060 = vld [vmem:[#allocation7 + $0x38] sm:$0xf]
    %v1061 = vld [vmem:[#allocation7 + $0x3c] sm:$0xf]
    %v1062 = vld [vmem:[#allocation7 + $0x40] sm:$0xf]
    %v1063 = vld [vmem:[#allocation7 + $0x44] sm:$0xf]
    %v1064 = vld [vmem:[#allocation7 + $0x48] sm:$0xf]
    %v1065 = vld [vmem:[#allocation7 + $0x4c] sm:$0xf]
    %v1066 = vld [vmem:[#allocation7 + $0x50] sm:$0xf]
    %v1067 = vld [vmem:[#allocation7 + $0x54] sm:$0xf]
    %v1068 = vld [vmem:[#allocation7 + $0x58] sm:$0xf]
    %v1069 = vld [vmem:[#allocation7 + $0x5c] sm:$0xf]
    %v1070 = vld [vmem:[#allocation7 + $0x60] sm:$0xf]
    %v1071 = vld [vmem:[#allocation7 + $0x64] sm:$0xf]
    %v1072 = vld [vmem:[#allocation7 + $0x68] sm:$0xf]
    %v1073 = vld [vmem:[#allocation7 + $0x6c] sm:$0xf]
    %v1074 = vld [vmem:[#allocation7 + $0x70] sm:$0xf]
    %v1075 = vld [vmem:[#allocation7 + $0x74] sm:$0xf]
    %v1076 = vld [vmem:[#allocation7 + $0x78] sm:$0xf]
    %v1077 = vld [vmem:[#allocation7 + $0x7c] sm:$0xf]
    %v1078 = vld [vmem:[#allocation7 + $0x80] sm:$0xf]
    %v1079 = vld [vmem:[#allocation7 + $0x84] sm:$0xf]
    %v1080 = vld [vmem:[#allocation7 + $0x88] sm:$0xf]
    %v1081 = vld [vmem:[#allocation7 + $0x8c] sm:$0xf]
    %v1082 = vld [vmem:[#allocation7 + $0x90] sm:$0xf]
    %v1083 = vld [vmem:[#allocation7 + $0x94] sm:$0xf]
    %v1084 = vld [vmem:[#allocation7 + $0x98] sm:$0xf]
    %v1085 = vld [vmem:[#allocation7 + $0x9c] sm:$0xf]
    %v1086 = vld [vmem:[#allocation7 + $0xa0] sm:$0xf]
    %v1087 = vld [vmem:[#allocation7 + $0xa4] sm:$0xf]
    %v1088 = vld [vmem:[#allocation7 + $0xa8] sm:$0xf]
    %v1089 = vld [vmem:[#allocation7 + $0xac] sm:$0xf]
    %v1090 = vld [vmem:[#allocation7 + $0xb0] sm:$0xf]
    %v1091 = vld [vmem:[#allocation7 + $0xb4] sm:$0xf]
    %v1092 = vld [vmem:[#allocation7 + $0xb8] sm:$0xf]
    %v1093 = vld [vmem:[#allocation7 + $0xbc] sm:$0xf]
    %v1094 = vld [vmem:[%s6] sm:$0x1]
    %v1096 = vlaneseq
    %v1097 = vshrl.u32 %v1096, 7
    %v1098 = vsub.s32 0, %v1097
    %v1099 = vrot.slane %v1094, %v1098
    %v1149 = vunpack.c.l.b16 %v1046
    %v1150 = vunpack.c.l.b16 %v1047
    %v1151 = vunpack.c.l.b16 %v1048
    %v1152 = vunpack.c.l.b16 %v1049
    %v1153 = vunpack.c.l.b16 %v1050
    %v1154 = vunpack.c.l.b16 %v1051
    %v1155 = vunpack.c.l.b16 %v1052
    %v1156 = vunpack.c.l.b16 %v1053
    %v1157 = vunpack.c.l.b16 %v1054
    %v1158 = vunpack.c.l.b16 %v1055
    %v1159 = vunpack.c.l.b16 %v1056
    %v1160 = vunpack.c.l.b16 %v1057
    %v1161 = vunpack.c.l.b16 %v1058
    %v1162 = vunpack.c.l.b16 %v1059
    %v1163 = vunpack.c.l.b16 %v1060
    %v1164 = vunpack.c.l.b16 %v1061
    %v1165 = vunpack.c.l.b16 %v1062
    %v1166 = vunpack.c.l.b16 %v1063
    %v1167 = vunpack.c.l.b16 %v1064
    %v1168 = vunpack.c.l.b16 %v1065
    %v1169 = vunpack.c.l.b16 %v1066
    %v1170 = vunpack.c.l.b16 %v1067
    %v1171 = vunpack.c.l.b16 %v1068
    %v1172 = vunpack.c.l.b16 %v1069
    %v1173 = vunpack.c.l.b16 %v1070
    %v1174 = vunpack.c.l.b16 %v1071
    %v1175 = vunpack.c.l.b16 %v1072
    %v1176 = vunpack.c.l.b16 %v1073
    %v1177 = vunpack.c.l.b16 %v1074
    %v1178 = vunpack.c.l.b16 %v1075
    %v1179 = vunpack.c.l.b16 %v1076
    %v1180 = vunpack.c.l.b16 %v1077
    %v1181 = vunpack.c.l.b16 %v1078
    %v1182 = vunpack.c.l.b16 %v1079
    %v1183 = vunpack.c.l.b16 %v1080
    %v1184 = vunpack.c.l.b16 %v1081
    %v1185 = vunpack.c.l.b16 %v1082
    %v1186 = vunpack.c.l.b16 %v1083
    %v1187 = vunpack.c.l.b16 %v1084
    %v1188 = vunpack.c.l.b16 %v1085
    %v1189 = vunpack.c.l.b16 %v1086
    %v1190 = vunpack.c.l.b16 %v1087
    %v1191 = vunpack.c.l.b16 %v1088
    %v1192 = vunpack.c.l.b16 %v1089
    %v1193 = vunpack.c.l.b16 %v1090
    %v1194 = vunpack.c.l.b16 %v1091
    %v1195 = vunpack.c.l.b16 %v1092
    %v1196 = vunpack.c.l.b16 %v1093
    %v1197 = vpack.c.b16 %v1150, %v1149
    %v1198 = vpack.c.b16 %v1152, %v1151
    %v1199 = vpack.c.b16 %v1154, %v1153
    %v1200 = vpack.c.b16 %v1156, %v1155
    %v1201 = vpack.c.b16 %v1158, %v1157
    %v1202 = vpack.c.b16 %v1160, %v1159
    %v1203 = vpack.c.b16 %v1162, %v1161
    %v1204 = vpack.c.b16 %v1164, %v1163
    %v1205 = vpack.c.b16 %v1166, %v1165
    %v1206 = vpack.c.b16 %v1168, %v1167
    %v1207 = vpack.c.b16 %v1170, %v1169
    %v1208 = vpack.c.b16 %v1172, %v1171
    %v1209 = vpack.c.b16 %v1174, %v1173
    %v1210 = vpack.c.b16 %v1176, %v1175
    %v1211 = vpack.c.b16 %v1178, %v1177
    %v1212 = vpack.c.b16 %v1180, %v1179
    %v1213 = vpack.c.b16 %v1182, %v1181
    %v1214 = vpack.c.b16 %v1184, %v1183
    %v1215 = vpack.c.b16 %v1186, %v1185
    %v1216 = vpack.c.b16 %v1188, %v1187
    %v1217 = vpack.c.b16 %v1190, %v1189
    %v1218 = vpack.c.b16 %v1192, %v1191
    %v1219 = vpack.c.b16 %v1194, %v1193
    %v1220 = vpack.c.b16 %v1196, %v1195
    %1245 = vmatprep.subr.bf16.mxu0 0
    %1246 = vmatpush1.bf16.msra.mxu0 %v1197
    %1247 = vmatprep.subr.bf16.mxu0 0
    %1248 = vmatpush1.bf16.msra.mxu0 %v1198
    %1249 = vmatprep.subr.bf16.mxu0 0
    %1250 = vmatpush1.bf16.msra.mxu0 %v1199
    %1251 = vmatprep.subr.bf16.mxu0 0
    %1252 = vmatpush1.bf16.msra.mxu0 %v1200
    %1253 = vmatprep.subr.bf16.mxu0 0
    %1254 = vmatpush1.bf16.msra.mxu0 %v1201
    %1255 = vmatprep.subr.bf16.mxu0 0
    %1256 = vmatpush1.bf16.msra.mxu0 %v1202
    %1257 = vmatprep.subr.bf16.mxu0 0
    %1258 = vmatpush1.bf16.msra.mxu0 %v1203
    %1259 = vmatprep.subr.bf16.mxu0 0
    %1260 = vmatpush1.bf16.msra.mxu0 %v1204
    %1261 = vmatprep.subr.bf16.mxu0 0
    %1262 = vmatpush1.bf16.msra.mxu0 %v1205
    %1263 = vmatprep.subr.bf16.mxu0 0
    %1264 = vmatpush1.bf16.msra.mxu0 %v1206
    %1265 = vmatprep.subr.bf16.mxu0 0
    %1266 = vmatpush1.bf16.msra.mxu0 %v1207
    %1267 = vmatprep.subr.bf16.mxu0 0
    %1268 = vmatpush1.bf16.msra.mxu0 %v1208
    %1269 = vmatprep.subr.bf16.mxu0 0
    %1270 = vmatpush1.bf16.msra.mxu0 %v1209
    %1271 = vmatprep.subr.bf16.mxu0 0
    %1272 = vmatpush1.bf16.msra.mxu0 %v1210
    %1273 = vmatprep.subr.bf16.mxu0 0
    %1274 = vmatpush1.bf16.msra.mxu0 %v1211
    %1275 = vmatprep.subr.bf16.mxu0 0
    %1276 = vmatpush1.bf16.msra.mxu0 %v1212
    %1277 = vmatprep.mubr.bf16.mxu0 %v1044
    %1278 = vmatmul.mubr.bf16.gmra.mrb[0].mxu0 %v1043
    %v1279 = vpop.f32.mrb[0].mxu0
    %v1280 = vadd.f32 %v1099, %v1279
    %v1281 = vpop.f32.mrb[0].mxu0
    %v1282 = vpop.f32.mrb[0].mxu0
    %v1283 = vpop.f32.mrb[0].mxu0
    %1284 = vdwg.mxu0
    %1285 = vmatprep.subr.bf16.mxu0 0
    %1286 = vmatpush1.bf16.msra.mxu0 %v1213
    %1287 = vmatprep.subr.bf16.mxu0 0
    %1288 = vmatpush1.bf16.msra.mxu0 %v1214
    %1289 = vmatprep.subr.bf16.mxu0 0
    %1290 = vmatpush1.bf16.msra.mxu0 %v1215
    %1291 = vmatprep.subr.bf16.mxu0 0
    %1292 = vmatpush1.bf16.msra.mxu0 %v1216
    %1293 = vmatprep.subr.bf16.mxu0 0
    %1294 = vmatpush1.bf16.msra.mxu0 %v1217
    %1295 = vmatprep.subr.bf16.mxu0 0
    %1296 = vmatpush1.bf16.msra.mxu0 %v1218
    %1297 = vmatprep.subr.bf16.mxu0 0
    %1298 = vmatpush1.bf16.msra.mxu0 %v1219
    %1299 = vmatprep.subr.bf16.mxu0 0
    %1300 = vmatpush1.bf16.msra.mxu0 %v1220
    %1301 = vmatprep.subr.bf16.mxu0 0
    %1302 = vmatpush1.bf16.msra.mxu0 0
    %1303 = vmatprep.subr.bf16.mxu0 0
    %1304 = vmatpush1.bf16.msra.mxu0 0
    %1305 = vmatprep.subr.bf16.mxu0 0
    %1306 = vmatpush1.bf16.msra.mxu0 0
    %1307 = vmatprep.subr.bf16.mxu0 0
    %1308 = vmatpush1.bf16.msra.mxu0 0
    %1309 = vmatprep.subr.bf16.mxu0 0
    %1310 = vmatpush1.bf16.msra.mxu0 0
    %1311 = vmatprep.subr.bf16.mxu0 0
    %1312 = vmatpush1.bf16.msra.mxu0 0
    %1313 = vmatprep.subr.bf16.mxu0 0
    %1314 = vmatpush1.bf16.msra.mxu0 0
    %1315 = vmatprep.subr.bf16.mxu0 0
    %1316 = vmatpush1.bf16.msra.mxu0 0
    %1317 = vmatprep.mubr.bf16.mxu0 0
    %1318 = vmatmul.mubr.bf16.gmra.mrb[0].mxu0 %v1045
    %v1319 = vpop.f32.mrb[0].mxu0
    %v1320 = vadd.f32 %v1280, %v1319
    %v1321 = vpop.f32.mrb[0].mxu0
    %v1322 = vpop.f32.mrb[0].mxu0
    %v1323 = vpop.f32.mrb[0].mxu0
    %1324 = vdwg.mxu0
    %1325 = vst [vmem:[%s7] sm:$0xff] %v1320
    // Predicated region
    $region46: #{net_forward.1} parent=1 // pred_check
      _
    $region47: #{net_forward.1} parent=1 // pred_check_branch
      %1327 = sbr.rel (0) target = $region49
    $region48: #{net_forward.1} parent=1 // pred_region
      _
    $region49: #{net_forward.1} parent=1 // pred_fallthru
      _
    // Predicated region
    $region50: #{net_forward.1} parent=1 // pred_check
      _
    $region51: #{net_forward.1} parent=1 // pred_check_branch
      %1329 = sbr.rel (0) target = $region53
    $region52: #{net_forward.1} parent=1 // pred_region
      _
    $region53: #{net_forward.1} parent=1 // pred_fallthru
      _
    %1330 = vsyncpa [#allocation3], 1
    %1331 = vsyncpa [#allocation5], 1
    %1332 = vsyncpa [#allocation8], 1

</llo_original>
